<compile_context>
chip_gen: v7x
topology: tpu7x:2x2x1
jax: 0.10.0
libtpu: 0.0.40
codegen_flags: <defaults>
</compile_context>

<pallas_src>
import functools

import jax
import jax.numpy as jnp
from jax.experimental import pallas as pl
from jax.experimental.pallas import tpu as pltpu


def _round_up(a: int, b: int) -> int:
    return (a + b - 1) // b * b


def _cdiv(a: int, b: int) -> int:
    return (a + b - 1) // b


def _vmem_budget():
    """(vmem_limit_bytes, block_budget_bytes) for the current TPU generation."""
    try:
        cap = int(pltpu.get_tpu_info().vmem_capacity_bytes)
    except Exception:  # query unavailable -> conservative (v7x-sized) fallback
        cap = 64 * 1024 * 1024
    vmem_limit = (min(cap, 128 * 1024 * 1024) * 3) // 4   # 96 MiB v5e/v6e, 48 MiB v7x
    budget = max(vmem_limit - (8 << 20), 8 << 20)          # headroom for compiler scratch
    return vmem_limit, budget


# ----------------------------------------------------------------------------
# Single-pass path: one (TR, S) block holds the full spatial extent per row.
# ----------------------------------------------------------------------------
def _adain_rows_kernel(x_ref, y_ref, o_ref, *, inv_hw):
    xf = x_ref[...].astype(jnp.float32)
    yf = y_ref[...].astype(jnp.float32)

    # Shifted one-pass stats (pivot = first spatial element of each row), f32.
    px = xf[:, 0:1]
    py = yf[:, 0:1]
    dx = xf - px
    dy = yf - py
    mdx = jnp.sum(dx, axis=-1, keepdims=True) * inv_hw
    mdy = jnp.sum(dy, axis=-1, keepdims=True) * inv_hw
    var_x = jnp.maximum(jnp.sum(dx * dx, axis=-1, keepdims=True) * inv_hw - mdx * mdx, 0.0)
    var_y = jnp.maximum(jnp.sum(dy * dy, axis=-1, keepdims=True) * inv_hw - mdy * mdy, 0.0)

    # Per-row scale instead of a per-element divide.  NOTE: no epsilon
    # (matches the PyTorch module): a spatially constant x row yields inf/nan
    # exactly like the reference's division by zero.
    scale = jnp.sqrt(var_y) * jax.lax.rsqrt(var_x)          # (TR, 1)
    mu_x = px + mdx
    mu_y = py + mdy

    # Normalize in f32; single rounding on the final store.
    o_ref[...] = ((xf - mu_x) * scale + mu_y).astype(o_ref.dtype)


def _adain_rows(x2, y2, r_pad, s, vmem_limit, budget):
    itemsize = jnp.dtype(x2.dtype).itemsize
    # Per 8-row slab: 3 arrays x 2 pipeline buffers (input dtype) plus ~4
    # tile-sized f32 temporaries Mosaic may materialize.
    per_row = s * (6 * itemsize + 4 * 4)
    tr = max(8, (budget // per_row) // 8 * 8)
    tr_cap = max(8, ((8 << 20) // (s * itemsize)) // 8 * 8)   # <= ~8 MiB / input block
    tr = min(tr, tr_cap, r_pad)
    # Keep >= ~8 grid steps (pipelining + v7x 2-TC sharding) unless that would
    # shrink blocks below ~512 KiB.
    tr_steps = _round_up(_cdiv(r_pad, 8), 8)
    if tr_steps * s * itemsize >= (512 << 10):
        tr = min(tr, tr_steps)
    tr = max(8, tr)
    grid = _cdiv(r_pad, tr)

    spec = pl.BlockSpec((tr, s), lambda i: (i, 0))
    return pl.pallas_call(
        functools.partial(_adain_rows_kernel, inv_hw=1.0 / float(s)),
        out_shape=jax.ShapeDtypeStruct((r_pad, s), x2.dtype),
        grid_spec=pltpu.PrefetchScalarGridSpec(
            num_scalar_prefetch=0,
            grid=(grid,),
            in_specs=[spec, spec],
            out_specs=spec,
        ),
        compiler_params=pltpu.CompilerParams(
            dimension_semantics=("parallel",),
            vmem_limit_bytes=vmem_limit,
        ),
    )(x2, y2)


# ----------------------------------------------------------------------------
# Chunked path: spatial axis split into an "arbitrary" reduction axis.
# ----------------------------------------------------------------------------
def _adain_stats_kernel(x_ref, y_ref, mux_ref, muy_ref, scale_ref,
                        sdx, sdx2, sdy, sdy2, px_s, py_s,
                        *, s_true, s_chunk, inv_hw):
    k = pl.program_id(1)
    xf = x_ref[...].astype(jnp.float32)
    yf = y_ref[...].astype(jnp.float32)

    @pl.when(k == 0)
    def _():
        px_s[...] = xf[:, 0:1]
        py_s[...] = yf[:, 0:1]
        sdx[...] = jnp.zeros_like(sdx)
        sdx2[...] = jnp.zeros_like(sdx2)
        sdy[...] = jnp.zeros_like(sdy)
        sdy2[...] = jnp.zeros_like(sdy2)

    dx = xf - px_s[...]
    dy = yf - py_s[...]
    if s_true % s_chunk != 0:
        # The last chunk overhangs the true spatial extent: mask garbage lanes.
        lane = jax.lax.broadcasted_iota(jnp.int32, xf.shape, 1)
        in_bounds = (k * s_chunk + lane) < s_true
        dx = jnp.where(in_bounds, dx, 0.0)
        dy = jnp.where(in_bounds, dy, 0.0)

    sdx[...] += jnp.sum(dx, axis=-1, keepdims=True)
    sdx2[...] += jnp.sum(dx * dx, axis=-1, keepdims=True)
    sdy[...] += jnp.sum(dy, axis=-1, keepdims=True)
    sdy2[...] += jnp.sum(dy * dy, axis=-1, keepdims=True)

    @pl.when(k == pl.num_programs(1) - 1)
    def _():
        mdx = sdx[...] * inv_hw
        mdy = sdy[...] * inv_hw
        var_x = jnp.maximum(sdx2[...] * inv_hw - mdx * mdx, 0.0)
        var_y = jnp.maximum(sdy2[...] * inv_hw - mdy * mdy, 0.0)
        mux_ref[...] = px_s[...] + mdx
        muy_ref[...] = py_s[...] + mdy
        scale_ref[...] = jnp.sqrt(var_y) * jax.lax.rsqrt(var_x)


def _adain_norm_kernel(x_ref, mux_ref, muy_ref, scale_ref, o_ref):
    xf = x_ref[...].astype(jnp.float32)
    o_ref[...] = ((xf - mux_ref[...]) * scale_ref[...] + muy_ref[...]).astype(o_ref.dtype)


def _adain_chunked(x2, y2, r_pad, s, vmem_limit, budget, spatial_chunk):
    dtype = x2.dtype
    itemsize = jnp.dtype(dtype).itemsize
    tr = min(r_pad, 64)                                  # r_pad is a multiple of 8
    if spatial_chunk is not None:
        sc = _round_up(max(int(spatial_chunk), 1), 128)
    else:
        # ~2 MiB per input block: safe under every generation's budget with
        # double buffering + f32 temporaries; lane-dense multiple of 128.
        sc = max(128, min(2 << 20, budget // 8) // (tr * itemsize) // 128 * 128)
    sc = min(sc, _round_up(s, 128))
    ks = _cdiv(s, sc)
    rt = _cdiv(r_pad, tr)
    inv_hw = 1.0 / float(s)

    xy_spec = pl.BlockSpec((tr, sc), lambda i, k: (i, k))
    stat_spec = pl.BlockSpec((tr, 1), lambda i, k: (i, 0))
    stat_shape = jax.ShapeDtypeStruct((r_pad, 1), jnp.float32)

    # Pass 1: per-row mu_x, mu_y and scale = sigma_y / sigma_x.
    mu_x, mu_y, scale = pl.pallas_call(
        functools.partial(_adain_stats_kernel, s_true=s, s_chunk=sc, inv_hw=inv_hw),
        out_shape=(stat_shape, stat_shape, stat_shape),
        grid_spec=pltpu.PrefetchScalarGridSpec(
            num_scalar_prefetch=0,
            grid=(rt, ks),
            in_specs=[xy_spec, xy_spec],
            out_specs=(stat_spec, stat_spec, stat_spec),
            scratch_shapes=[pltpu.VMEM((tr, 1), jnp.float32) for _ in range(6)],
        ),
        compiler_params=pltpu.CompilerParams(
            dimension_semantics=("parallel", "arbitrary"),
            vmem_limit_bytes=vmem_limit,
        ),
    )(x2, y2)

    # Pass 2: normalize chunk-by-chunk (re-reads x; unavoidable when a full
    # spatial row does not fit in VMEM).
    return pl.pallas_call(
        _adain_norm_kernel,
        out_shape=jax.ShapeDtypeStruct((r_pad, s), dtype),
        grid_spec=pltpu.PrefetchScalarGridSpec(
            num_scalar_prefetch=0,
            grid=(rt, ks),
            in_specs=[xy_spec, stat_spec, stat_spec, stat_spec],
            out_specs=xy_spec,
        ),
        compiler_params=pltpu.CompilerParams(
            dimension_semantics=("parallel", "parallel"),
            vmem_limit_bytes=vmem_limit,
        ),
    )(x2, mu_x, mu_y, scale)


# ----------------------------------------------------------------------------
# Public entry point.
# ----------------------------------------------------------------------------
def adain(x, y, *, spatial_chunk=None):
    """AdaIN(x, y) for NCHW inputs; matches the PyTorch module (no epsilon).

    spatial_chunk: optional int forcing the chunked (large-H*W) path with the
    given spatial chunk size; by default the chunked path is used only when a
    full spatial row does not fit the per-generation VMEM budget.
    """
    assert x.shape == y.shape and x.ndim == 4
    n, c, h, w = x.shape
    r, s = n * c, h * w
    itemsize = jnp.dtype(x.dtype).itemsize

    x2 = x.reshape(r, s)
    y2 = y.reshape(r, s)

    # Rows only need to be a sublane (8) multiple; pad in the rare case they
    # are not.  The lane axis is never padded (block last dim == array dim).
    r_pad = _round_up(r, 8)
    if r_pad != r:
        x2 = jnp.pad(x2, ((0, r_pad - r), (0, 0)))
        y2 = jnp.pad(y2, ((0, r_pad - r), (0, 0)))

    vmem_limit, budget = _vmem_budget()
    per_row = s * (6 * itemsize + 4 * 4)
    if spatial_chunk is None and per_row * 8 <= budget:
        out2 = _adain_rows(x2, y2, r_pad, s, vmem_limit, budget)
    else:
        out2 = _adain_chunked(x2, y2, r_pad, s, vmem_limit, budget, spatial_chunk)

    if r_pad != r:
        out2 = out2[:r]
    return out2.reshape(n, c, h, w)


def _adain_ref(x, y):
    # Pure-JAX reference mirroring the PyTorch module.
    mu = lambda t: jnp.mean(t, axis=(2, 3), keepdims=True)
    sig = lambda t: jnp.sqrt(jnp.mean((t - mu(t)) ** 2, axis=(2, 3), keepdims=True))
    return sig(y) * (x - mu(x)) / sig(x) + mu(y)


if __name__ == "__main__":
    key = jax.random.PRNGKey(0)
    kx, ky = jax.random.split(key)
    N, C, H, W = 2, 4, 16, 16
    x = jax.random.normal(kx, (N, C, H, W), dtype=jnp.float32)
    y = jax.random.normal(ky, (N, C, H, W), dtype=jnp.float32) * 2.0 + 0.5

    ref = _adain_ref(x, y)

    # Main (single-pass) path.
    out = adain(x, y)
    jax.block_until_ready(out)
    assert out.shape == (N, C, H, W)
    assert jnp.allclose(out, ref, atol=1e-4, rtol=1e-4), "rows path mismatch vs reference"

    # Exercise the chunked (large-H*W) fallback on the same small inputs.
    out_c = adain(x, y, spatial_chunk=128)
    jax.block_until_ready(out_c)
    assert jnp.allclose(out_c, ref, atol=1e-4, rtol=1e-4), "chunked path mismatch vs reference"

    print("KERNEL_OK")
</pallas_src>

<mosaic_0001>
module attributes {stable_mosaic.version = 11 : i64} {
  func.func @_adain_rows_kernel(%arg0: i32, %arg1: memref<8x256xf32, #tpu.memory_space<vmem>>, %arg2: memref<8x256xf32, #tpu.memory_space<vmem>>, %arg3: memref<8x256xf32, #tpu.memory_space<vmem>>) attributes {dimension_semantics = [#tpu.dimension_semantics<parallel>], iteration_bounds = array<i64: 1>, scalar_prefetch = 0 : i64, scratch_operands = 0 : i64, tpu.core_type = #tpu.core_type<tc>, window_params = [{transform_indices = @transform_0, window_bounds = array<i64: 8, 256>}, {transform_indices = @transform_1, window_bounds = array<i64: 8, 256>}, {transform_indices = @transform_2, window_bounds = array<i64: 8, 256>}]} {
    %c0 = arith.constant 0 : index
    %c0_0 = arith.constant 0 : index
    %0 = vector.load %arg1[%c0, %c0_0] : memref<8x256xf32, #tpu.memory_space<vmem>>, vector<8x256xf32>
    %c0_1 = arith.constant 0 : index
    %c0_2 = arith.constant 0 : index
    %1 = vector.load %arg2[%c0_1, %c0_2] : memref<8x256xf32, #tpu.memory_space<vmem>>, vector<8x256xf32>
    %2 = vector.extract_strided_slice %0 {offsets = [0, 0], sizes = [8, 1], strides = [1, 1]} : vector<8x256xf32> to vector<8x1xf32>
    %3 = vector.extract_strided_slice %1 {offsets = [0, 0], sizes = [8, 1], strides = [1, 1]} : vector<8x256xf32> to vector<8x1xf32>
    %4 = vector.broadcast %2 : vector<8x1xf32> to vector<8x256xf32>
    %5 = arith.subf %0, %4 : vector<8x256xf32>
    %6 = vector.broadcast %3 : vector<8x1xf32> to vector<8x256xf32>
    %7 = arith.subf %1, %6 : vector<8x256xf32>
    %cst = arith.constant dense<0.000000e+00> : vector<8xf32>
    %8 = vector.multi_reduction <add>, %5, %cst [1] : vector<8x256xf32> to vector<8xf32>
    %9 = vector.shape_cast %8 : vector<8xf32> to vector<8x1xf32>
    %cst_3 = arith.constant 3.906250e-03 : f32
    %10 = vector.broadcast %cst_3 : f32 to vector<8x1xf32>
    %11 = arith.mulf %9, %10 : vector<8x1xf32>
    %cst_4 = arith.constant dense<0.000000e+00> : vector<8xf32>
    %12 = vector.multi_reduction <add>, %7, %cst_4 [1] : vector<8x256xf32> to vector<8xf32>
    %13 = vector.shape_cast %12 : vector<8xf32> to vector<8x1xf32>
    %cst_5 = arith.constant 3.906250e-03 : f32
    %14 = vector.broadcast %cst_5 : f32 to vector<8x1xf32>
    %15 = arith.mulf %13, %14 : vector<8x1xf32>
    %16 = arith.mulf %5, %5 : vector<8x256xf32>
    %cst_6 = arith.constant dense<0.000000e+00> : vector<8xf32>
    %17 = vector.multi_reduction <add>, %16, %cst_6 [1] : vector<8x256xf32> to vector<8xf32>
    %18 = vector.shape_cast %17 : vector<8xf32> to vector<8x1xf32>
    %cst_7 = arith.constant 3.906250e-03 : f32
    %19 = vector.broadcast %cst_7 : f32 to vector<8x1xf32>
    %20 = arith.mulf %18, %19 : vector<8x1xf32>
    %21 = arith.mulf %11, %11 : vector<8x1xf32>
    %22 = arith.subf %20, %21 : vector<8x1xf32>
    %cst_8 = arith.constant 0.000000e+00 : f32
    %23 = vector.broadcast %cst_8 : f32 to vector<8x1xf32>
    %24 = arith.maximumf %22, %23 : vector<8x1xf32>
    %25 = arith.mulf %7, %7 : vector<8x256xf32>
    %cst_9 = arith.constant dense<0.000000e+00> : vector<8xf32>
    %26 = vector.multi_reduction <add>, %25, %cst_9 [1] : vector<8x256xf32> to vector<8xf32>
    %27 = vector.shape_cast %26 : vector<8xf32> to vector<8x1xf32>
    %cst_10 = arith.constant 3.906250e-03 : f32
    %28 = vector.broadcast %cst_10 : f32 to vector<8x1xf32>
    %29 = arith.mulf %27, %28 : vector<8x1xf32>
    %30 = arith.mulf %15, %15 : vector<8x1xf32>
    %31 = arith.subf %29, %30 : vector<8x1xf32>
    %cst_11 = arith.constant 0.000000e+00 : f32
    %32 = vector.broadcast %cst_11 : f32 to vector<8x1xf32>
    %33 = arith.maximumf %31, %32 : vector<8x1xf32>
    %34 = math.sqrt %33 : vector<8x1xf32>
    %35 = math.rsqrt %24 : vector<8x1xf32>
    %36 = arith.mulf %34, %35 : vector<8x1xf32>
    %37 = arith.addf %2, %11 : vector<8x1xf32>
    %38 = arith.addf %3, %15 : vector<8x1xf32>
    %39 = vector.broadcast %37 : vector<8x1xf32> to vector<8x256xf32>
    %40 = arith.subf %0, %39 : vector<8x256xf32>
    %41 = vector.broadcast %36 : vector<8x1xf32> to vector<8x256xf32>
    %42 = arith.mulf %40, %41 : vector<8x256xf32>
    %43 = vector.broadcast %38 : vector<8x1xf32> to vector<8x256xf32>
    %44 = arith.addf %42, %43 : vector<8x256xf32>
    %c0_12 = arith.constant 0 : index
    %c0_13 = arith.constant 0 : index
    %45 = vector.load %arg3[%c0_12, %c0_13] : memref<8x256xf32, #tpu.memory_space<vmem>>, vector<8x256xf32>
    tpu.vector_store %arg3[%c0_12, %c0_13], %44 {strides = array<i32>} : memref<8x256xf32, #tpu.memory_space<vmem>>, vector<8x256xf32>,
    return
  }
  func.func @transform_0(%arg0: i32) -> (i32, i32) {
    %c0_i32 = arith.constant 0 : i32
    %c0_i32_0 = arith.constant 0 : i32
    return %arg0, %c0_i32 : i32, i32
  }
  func.func @transform_1(%arg0: i32) -> (i32, i32) {
    %c0_i32 = arith.constant 0 : i32
    %c0_i32_0 = arith.constant 0 : i32
    return %arg0, %c0_i32 : i32, i32
  }
  func.func @transform_2(%arg0: i32) -> (i32, i32) {
    %c0_i32 = arith.constant 0 : i32
    %c0_i32_0 = arith.constant 0 : i32
    return %arg0, %c0_i32 : i32, i32
  }
}

</mosaic_0001>

<llo_original>
// kernel: tpu_custom_call.1
$region0: #{tpu_custom_call.1}
  #allocation0 [shape = 'u32[]', space=smem, size = 0x4, offset = 0x4, fixed_abs, tag = 'smem constant byte address 0x4 - core index']
  #allocation1 [shape = 'u32[144,128]{1,0:T(1,128)}', space=vmem, size = 0x12000, scoped, tag = 'internal scratch']
  %s0 = inlined_call_operand.hbm [shape: f32[8,256], index: 0, kind: input, shape index: {}]
  %s1 = inlined_call_operand.hbm [shape: f32[8,256], index: 1, kind: input, shape index: {}]
  %s2 = inlined_call_operand.hbm [shape: f32[8,256], index: 2, kind: output, shape index: {}]
  %s3 = sld [smem:[#allocation0]]
  $region26: #{tpu_custom_call.1} parent=0
    _
  %s5 = ssub.s32 1, %s3
  %s6 = scalar_select 0, %s5, %s3
  $region1: #{tpu_custom_call.1} parent=0
    #allocation2 [shape = 'u8[8192]{0}', space=vmem, size = 0x2000, scoped, tag = 'input window, operand 0, single buffered']
    #allocation3 [shape = 's32[1]{0}', space=sflag, size = 0x4, scoped, tag = 'scoped memory for tpu_custom_call.1']
    #allocation4 [shape = 's32[1]{0}', space=sflag, size = 0x4, scoped, tag = 'scoped memory for tpu_custom_call.1']
    #allocation5 [shape = 'u8[8192]{0}', space=vmem, size = 0x2000, scoped, tag = 'input window, operand 1, single buffered']
    #allocation6 [shape = 's32[1]{0}', space=sflag, size = 0x4, scoped, tag = 'scoped memory for tpu_custom_call.1']
    #allocation7 [shape = 'u8[8192]{0}', space=vmem, size = 0x2000, scoped, tag = 'output window, operand 0, single buffered']
    %7 = vsyncpa [#allocation3], 0
    %8 = vsyncpa [#allocation6], 0
    %9 = vsyncpa [#allocation4], 0
    // Predicated region
    $region2: #{tpu_custom_call.1} parent=1 // pred_check
      _
    $region3: #{tpu_custom_call.1} parent=1 // pred_check_branch
      %11 = sbr.rel (0) target = $region5
    $region4: #{tpu_custom_call.1} parent=1 // pred_region
      %s13 = ssub.s32 256, 256
      %14 = vsyncadd [#allocation3], %s13
      %s16 = sshll.u32 [#allocation2], 4
      %s17 = int_to_ptr.vmem [resolvable:$true] %s16
      %19 = dma.hbm_to_vmem [thread:$0]  %s0, 256, %s17, [#allocation3]
    $region5: #{tpu_custom_call.1} parent=1 // pred_fallthru
      _
    // Predicated region
    $region6: #{tpu_custom_call.1} parent=1 // pred_check
      _
    $region7: #{tpu_custom_call.1} parent=1 // pred_check_branch
      %21 = sbr.rel (0) target = $region9
    $region8: #{tpu_custom_call.1} parent=1 // pred_region
      %s23 = ssub.s32 256, 256
      %24 = vsyncadd [#allocation6], %s23
      %s26 = sshll.u32 [#allocation5], 4
      %s27 = int_to_ptr.vmem [resolvable:$true] %s26
      %29 = dma.hbm_to_vmem [thread:$0]  %s1, 256, %s27, [#allocation6]
    $region9: #{tpu_custom_call.1} parent=1 // pred_fallthru
      _
    // Predicated region
    $region10: #{tpu_custom_call.1} parent=1 // pred_check
      _
    $region11: #{tpu_custom_call.1} parent=1 // pred_check_branch
      %31 = sbr.rel (0) target = $region13
    $region12: #{tpu_custom_call.1} parent=1 // pred_region
      %32 = dma.done [#allocation3], 256
    $region13: #{tpu_custom_call.1} parent=1 // pred_fallthru
      _
    // Predicated region
    $region14: #{tpu_custom_call.1} parent=1 // pred_check
      _
    $region15: #{tpu_custom_call.1} parent=1 // pred_check_branch
      %34 = sbr.rel (0) target = $region17
    $region16: #{tpu_custom_call.1} parent=1 // pred_region
      %35 = dma.done [#allocation6], 256
    $region17: #{tpu_custom_call.1} parent=1 // pred_fallthru
      _
    %v36 = vld [vmem:[#allocation2] sm:$0xff]
    %v37 = vld [vmem:[#allocation2 + $0x8] sm:$0xff]
    %v38 = vld [vmem:[#allocation5] sm:$0xff]
    %v39 = vld [vmem:[#allocation5 + $0x8] sm:$0xff]
    %41 = vset.pattern.permute.xlu0 0
    %42 = vperm.xlu0 %41, %v36
    %v43 = vpop.permute.xlu0 %42
    %v45 = vsub.f32 %v36, %v43
    %v46 = vsub.f32 %v37, %v43
    %48 = vset.pattern.permute.xlu0 0
    %49 = vperm.xlu0 %48, %v38
    %v50 = vpop.permute.xlu0 %49
    %v52 = vsub.f32 %v38, %v50
    %v53 = vsub.f32 %v39, %v50
    %v54 = vadd.f32 %v45, %v46
    %55 = vadd.xlane.f32.xlu0 %v54
    %v56 = vpop.xlane.xlu0 %55
    %v57 = vmul.f32 %v56, 0.00390625
    %v58 = vadd.f32 %v52, %v53
    %59 = vadd.xlane.f32.xlu0 %v58
    %v60 = vpop.xlane.xlu0 %59
    %v61 = vmul.f32 %v60, 0.00390625
    %v62 = vmul.f32 %v45, %v45
    %v63 = vmul.f32 %v46, %v46
    %v64 = vadd.f32 %v62, %v63
    %65 = vadd.xlane.f32.xlu0 %v64
    %v66 = vpop.xlane.xlu0 %65
    %v67 = vmul.f32 %v66, 0.00390625
    %v68 = vmul.f32 %v57, %v57
    %v69 = vsub.f32 %v67, %v68
    %v70 = vmax.f32 %v69, 0.0
    %v71 = vmul.f32 %v52, %v52
    %v72 = vmul.f32 %v53, %v53
    %v73 = vadd.f32 %v71, %v72
    %74 = vadd.xlane.f32.xlu0 %v73
    %v75 = vpop.xlane.xlu0 %74
    %v76 = vmul.f32 %v75, 0.00390625
    %v77 = vmul.f32 %v61, %v61
    %v78 = vsub.f32 %v76, %v77
    %v79 = vmax.f32 %v78, 0.0
    %v80 = vrsqrt.pop %v79
    %v81 = vmul.f32 %v79, %v80
    %vm82 = vcmp.eq.f32.partialorder %v79, inf
    %v83 = vsel %vm82, %v79, %v81
    %vm84 = vcmp.eq.f32.partialorder %v79, 0.0
    %v85 = vand.u32 %v79, 2147483648
    %v86 = vsel %vm84, %v85, %v83
    %v87 = vrsqrt.pop %v70
    %v88 = vmul.f32 %v86, %v87
    %v89 = vadd.f32 %v36, %v57
    %v90 = vadd.f32 %v38, %v61
    %92 = vset.pattern.permute.xlu0 0
    %93 = vperm.xlu0 %92, %v89
    %v94 = vpop.permute.xlu0 %93
    %v96 = vsub.f32 %v36, %v94
    %v97 = vsub.f32 %v37, %v94
    %v98 = vmul.f32 %v96, %v88
    %v99 = vmul.f32 %v97, %v88
    %101 = vset.pattern.permute.xlu0 0
    %102 = vperm.xlu0 %101, %v90
    %v103 = vpop.permute.xlu0 %102
    %v105 = vadd.f32 %v98, %v103
    %v106 = vadd.f32 %v99, %v103
    %107 = vst [vmem:[#allocation7] sm:$0xff] %v105
    %108 = vst [vmem:[#allocation7 + $0x8] sm:$0xff] %v106
    // Predicated region
    $region18: #{tpu_custom_call.1} parent=1 // pred_check
      _
    $region19: #{tpu_custom_call.1} parent=1 // pred_check_branch
      %110 = sbr.rel (0) target = $region21
    $region20: #{tpu_custom_call.1} parent=1 // pred_region
      %s112 = ssub.s32 256, 256
      %113 = vsyncadd [#allocation4], %s112
      %s115 = sshll.u32 [#allocation7], 4
      %s116 = int_to_ptr.vmem [resolvable:$true] %s115
      %118 = dma.vmem_to_hbm [thread:$0]  %s116, 256, %s2, [#allocation4]
    $region21: #{tpu_custom_call.1} parent=1 // pred_fallthru
      _
    // Predicated region
    $region22: #{tpu_custom_call.1} parent=1 // pred_check
      _
    $region23: #{tpu_custom_call.1} parent=1 // pred_check_branch
      %120 = sbr.rel (0) target = $region25
    $region24: #{tpu_custom_call.1} parent=1 // pred_region
      %121 = dma.done [#allocation4], 256
    $region25: #{tpu_custom_call.1} parent=1 // pred_fallthru
      _
    %122 = vsyncpa [#allocation3], 1
    %123 = vsyncpa [#allocation6], 1
    %124 = vsyncpa [#allocation4], 1

</llo_original>
